<compile_context>
chip_gen: v6e
topology: v6e:2x2x1
jax: 0.10.0
libtpu: 0.0.40
codegen_flags: <defaults>
</compile_context>

<pallas_src>
import jax
import jax.numpy as jnp
from jax.experimental import pallas as pl
from jax.experimental.pallas import tpu as pltpu


def _round_up(x, m):
    return ((x + m - 1) // m) * m


def patch_pos_emb_kernel(p_ref, w_ref, add_ref, o_ref):
    # p_ref:   (tile_m, D)      patch rows (zero row where the cls token goes)
    # w_ref:   (D, H_pad)       flattened conv weight (lane-dense, zero-padded)
    # add_ref: (tile_m, H_pad)  precomputed cls/bias/pos additive term
    # o_ref:   (tile_m, H_pad)  output tokens (lane-dense)
    proj = jnp.dot(p_ref[...], w_ref[...], preferred_element_type=jnp.float32)
    o_ref[...] = (proj + add_ref[...]).astype(o_ref.dtype)


def patch_and_pos_emb(x, conv_w, conv_b, cls_token, pos_emb, patch_size,
                      use_bf16=False):
    """x: (B, C, H, W) NCHW, parameters laid out like the PyTorch module.

    Returns (B, N+1, hidden) tokens, matching tokens.permute(0, 2, 1) of the
    reference module.
    """
    B, C, H_in, W_in = x.shape
    ph, pw = patch_size
    pn0, pn1 = H_in // ph, W_in // pw
    N = pn0 * pn1
    hidden = conv_w.shape[0]
    D = C * ph * pw

    # ---- glue: patchify + parameter reshapes (layout only, no math beyond adds) ----
    # TODO(synk): at large image sizes this transpose is a full HBM read+write;
    # if it dominates end-to-end, move the gather into the kernel via
    # memory_space=pl.ANY with per-patch strided DMAs.
    p = x.reshape(B, C, pn0, ph, pn1, pw)
    p = p.transpose(0, 2, 4, 1, 3, 5).reshape(B, N, D)          # (B, N, D)
    # zero row per batch in the cls position -> single aligned full-block store
    p = jnp.concatenate([jnp.zeros((B, 1, D), p.dtype), p], axis=1)
    M = B * (N + 1)
    p = p.reshape(M, D)

    # M-row tiling: multiples of 8 sublanes, cap tile at 256 rows.
    tile_m = min(256, _round_up(M, 8))
    M_pad = _round_up(M, tile_m)
    H_pad = _round_up(hidden, 128)                               # lane-dense output

    p = jnp.pad(p, ((0, M_pad - M), (0, 0)))

    w = conv_w.reshape(hidden, D).T                              # (D, hidden)
    w = jnp.pad(w, ((0, 0), (0, H_pad - hidden)))                # (D, H_pad)

    pos = pos_emb.reshape(hidden, N + 1).T                       # (N+1, hidden)
    cls = cls_token.reshape(hidden)
    bias = conv_b.reshape(hidden)
    add = jnp.concatenate(
        [(cls + pos[0])[None, :],                                # cls row
         bias[None, :] + pos[1:]],                               # patch rows
        axis=0).astype(jnp.float32)                              # (N+1, hidden)
    add = jnp.pad(add, ((0, 0), (0, H_pad - hidden)))
    add = jnp.tile(add, (B, 1))                                  # (M, H_pad)
    add = jnp.pad(add, ((0, M_pad - M), (0, 0)))

    if use_bf16:  # v6e/v7x: half the DMA bytes, 2x MXU; f32 accumulation kept.
        p = p.astype(jnp.bfloat16)
        w = w.astype(jnp.bfloat16)

    out = pl.pallas_call(
        patch_pos_emb_kernel,
        out_shape=jax.ShapeDtypeStruct((M_pad, H_pad), jnp.float32),
        grid=(M_pad // tile_m,),
        in_specs=[
            pl.BlockSpec((tile_m, D), lambda i: (i, 0)),
            pl.BlockSpec((D, H_pad), lambda i: (0, 0)),          # resident
            pl.BlockSpec((tile_m, H_pad), lambda i: (i, 0)),
        ],
        out_specs=pl.BlockSpec((tile_m, H_pad), lambda i: (i, 0)),
        compiler_params=pltpu.CompilerParams(
            dimension_semantics=("parallel",)),
    )(p, w, add)

    # drop row / lane padding and restore (B, N+1, hidden)
    return out[:M, :hidden].reshape(B, N + 1, hidden)


def _reference(x, conv_w, conv_b, cls_token, pos_emb, patch_size):
    """Pure-JAX reference reproducing the PyTorch forward."""
    B = x.shape[0]
    hidden = conv_w.shape[0]
    conv_out = jax.lax.conv_general_dilated(
        x, conv_w, window_strides=patch_size, padding="VALID",
        dimension_numbers=("NCHW", "OIHW", "NCHW"))
    conv_out = conv_out + conv_b.reshape(1, hidden, 1, 1)
    N = conv_out.shape[2] * conv_out.shape[3]
    tokens = conv_out.reshape(B, hidden, N)
    cls = jnp.broadcast_to(cls_token, (B, hidden, 1))
    tokens = jnp.concatenate([cls, tokens], axis=2)
    tokens = tokens + pos_emb
    return tokens.transpose(0, 2, 1)


if __name__ == "__main__":
    # Module config: input_size=(16,16), patch_size=(4,4), num_channels=3,
    # hidden_size = 3*4*4 = 48 (required for the module's reshape contract).
    input_size = (16, 16)
    patch_size = (4, 4)
    num_channels = 3
    hidden_size = num_channels * patch_size[0] * patch_size[1]  # 48
    pn = (input_size[0] // patch_size[0], input_size[1] // patch_size[1])
    seq = pn[0] * pn[1] + 1
    B = 2

    key = jax.random.PRNGKey(0)
    kx, kw, kb, kc, kp = jax.random.split(key, 5)

    x = jax.random.normal(kx, (B, num_channels, *input_size), dtype=jnp.float32)
    conv_w = jax.random.normal(
        kw, (hidden_size, num_channels, *patch_size), dtype=jnp.float32) * 0.05
    conv_b = jax.random.normal(kb, (hidden_size,), dtype=jnp.float32) * 0.05
    cls_token = jax.random.normal(kc, (1, hidden_size, 1), dtype=jnp.float32)
    pos_emb = jax.random.uniform(kp, (1, hidden_size, seq), dtype=jnp.float32)

    out = patch_and_pos_emb(x, conv_w, conv_b, cls_token, pos_emb, patch_size,
                            use_bf16=False)  # f32 path for exact-tolerance check
    out = jax.block_until_ready(out)

    ref = _reference(x, conv_w, conv_b, cls_token, pos_emb, patch_size)
    assert out.shape == (B, seq, hidden_size), out.shape
    assert jnp.allclose(out, ref, atol=1e-4, rtol=1e-4), "mismatch vs reference"

    print("KERNEL_OK")
</pallas_src>

<mosaic_0001>
module attributes {stable_mosaic.version = 11 : i64} {
  func.func @patch_pos_emb_kernel(%arg0: i32, %arg1: memref<40x48xf32, #tpu.memory_space<vmem>>, %arg2: memref<48x128xf32, #tpu.memory_space<vmem>>, %arg3: memref<40x128xf32, #tpu.memory_space<vmem>>, %arg4: memref<40x128xf32, #tpu.memory_space<vmem>>) attributes {dimension_semantics = [#tpu.dimension_semantics<parallel>], iteration_bounds = array<i64: 1>, scalar_prefetch = 0 : i64, scratch_operands = 0 : i64, tpu.core_type = #tpu.core_type<tc>, window_params = [{transform_indices = @transform_0, window_bounds = array<i64: 40, 48>}, {pipeline_mode = #tpu.pipeline_mode<synchronous>, transform_indices = @transform_1, window_bounds = array<i64: 48, 128>}, {transform_indices = @transform_2, window_bounds = array<i64: 40, 128>}, {transform_indices = @transform_3, window_bounds = array<i64: 40, 128>}]} {
    %c0 = arith.constant 0 : index
    %c0_0 = arith.constant 0 : index
    %0 = vector.load %arg1[%c0, %c0_0] : memref<40x48xf32, #tpu.memory_space<vmem>>, vector<40x48xf32>
    %c0_1 = arith.constant 0 : index
    %c0_2 = arith.constant 0 : index
    %1 = vector.load %arg2[%c0_1, %c0_2] : memref<48x128xf32, #tpu.memory_space<vmem>>, vector<48x128xf32>
    %cst = arith.constant dense<0.000000e+00> : vector<40x128xf32>
    %2 = tpu.matmul %0, %1, %cst {dimension_numbers = #tpu.dot_dimension_numbers<[1], [0], [0], [1], [0, 0, 1, 1], [], []>} : vector<40x48xf32>, vector<48x128xf32>, vector<40x128xf32> -> vector<40x128xf32>
    %c0_3 = arith.constant 0 : index
    %c0_4 = arith.constant 0 : index
    %3 = vector.load %arg3[%c0_3, %c0_4] : memref<40x128xf32, #tpu.memory_space<vmem>>, vector<40x128xf32>
    %4 = arith.addf %2, %3 : vector<40x128xf32>
    %c0_5 = arith.constant 0 : index
    %c0_6 = arith.constant 0 : index
    %5 = vector.load %arg4[%c0_5, %c0_6] : memref<40x128xf32, #tpu.memory_space<vmem>>, vector<40x128xf32>
    tpu.vector_store %arg4[%c0_5, %c0_6], %4 {strides = array<i32>} : memref<40x128xf32, #tpu.memory_space<vmem>>, vector<40x128xf32>,
    return
  }
  func.func @transform_0(%arg0: i32) -> (i32, i32) {
    %c0_i32 = arith.constant 0 : i32
    %c0_i32_0 = arith.constant 0 : i32
    return %arg0, %c0_i32 : i32, i32
  }
  func.func @transform_1(%arg0: i32) -> (i32, i32) {
    %c0_i32 = arith.constant 0 : i32
    %c0_i32_0 = arith.constant 0 : i32
    %c0_i32_1 = arith.constant 0 : i32
    return %c0_i32, %c0_i32_0 : i32, i32
  }
  func.func @transform_2(%arg0: i32) -> (i32, i32) {
    %c0_i32 = arith.constant 0 : i32
    %c0_i32_0 = arith.constant 0 : i32
    return %arg0, %c0_i32 : i32, i32
  }
  func.func @transform_3(%arg0: i32) -> (i32, i32) {
    %c0_i32 = arith.constant 0 : i32
    %c0_i32_0 = arith.constant 0 : i32
    return %arg0, %c0_i32 : i32, i32
  }
}

</mosaic_0001>

<llo_original>
// kernel: tpu_custom_call.1
$region0: #{tpu_custom_call.1}
  #allocation0 [shape = 'u32[]', space=smem, size = 0x4, offset = 0x4, fixed_abs, tag = 'smem constant byte address 0x4 - core index']
  #allocation1 [shape = 'u32[144,128]{1,0:T(1,128)}', space=vmem, size = 0x12000, scoped, tag = 'internal scratch']
  %s0 = inlined_call_operand.hbm [shape: f32[40,48], index: 0, kind: input, shape index: {}]
  %s1 = inlined_call_operand.hbm [shape: f32[48,128], index: 1, kind: input, shape index: {}]
  %s2 = inlined_call_operand.hbm [shape: f32[40,128], index: 2, kind: input, shape index: {}]
  %s3 = inlined_call_operand.hbm [shape: f32[40,128], index: 3, kind: output, shape index: {}]
  %s4 = sld [smem:[#allocation0]]
  $region34: #{tpu_custom_call.1} parent=0
    _
  %s6 = ssub.s32 1, %s4
  %s7 = scalar_select 0, %s6, %s4
  $region1: #{tpu_custom_call.1} parent=0
    #allocation2 [shape = 'u8[20480]{0}', space=vmem, size = 0x5000, scoped, tag = 'input window, operand 0, single buffered']
    #allocation3 [shape = 's32[1]{0}', space=sflag, size = 0x4, scoped, tag = 'scoped memory for tpu_custom_call.1']
    #allocation4 [shape = 's32[1]{0}', space=sflag, size = 0x4, scoped, tag = 'scoped memory for tpu_custom_call.1']
    #allocation5 [shape = 'u8[24576]{0}', space=vmem, size = 0x6000, scoped, tag = 'input window, operand 1, single buffered']
    #allocation6 [shape = 's32[1]{0}', space=sflag, size = 0x4, scoped, tag = 'scoped memory for tpu_custom_call.1']
    #allocation7 [shape = 'u8[20480]{0}', space=vmem, size = 0x5000, scoped, tag = 'input window, operand 2, single buffered']
    #allocation8 [shape = 'u8[20480]{0}', space=vmem, size = 0x5000, scoped, tag = 'output window, operand 0, single buffered']
    %8 = vsyncpa [#allocation3], 0
    %9 = vsyncpa [#allocation6], 0
    %10 = vsyncpa [#allocation4], 0
    // Predicated region
    $region2: #{tpu_custom_call.1} parent=1 // pred_check
      _
    $region3: #{tpu_custom_call.1} parent=1 // pred_check_branch
      %12 = sbr.rel (0) target = $region5
    $region4: #{tpu_custom_call.1} parent=1 // pred_region
      %s14 = ssub.s32 640, 640
      %15 = vsyncadd [#allocation3], %s14
      %s16 = sshll.u32 [#allocation2], 4
      %s17 = int_to_ptr.vmem [resolvable:$true] %s16
      %22 = dma.hbm_to_vmem [thread:$0]  %s0, 640, %s17, [#allocation3], 128, 128, 8
    $region5: #{tpu_custom_call.1} parent=1 // pred_fallthru
      _
    // Predicated region
    $region6: #{tpu_custom_call.1} parent=1 // pred_check
      _
    $region7: #{tpu_custom_call.1} parent=1 // pred_check_branch
      %24 = sbr.rel (0) target = $region9
    $region8: #{tpu_custom_call.1} parent=1 // pred_region
      %s26 = ssub.s32 768, 768
      %27 = vsyncadd [#allocation6], %s26
      %s28 = sshll.u32 [#allocation5], 4
      %s29 = int_to_ptr.vmem [resolvable:$true] %s28
      %34 = dma.hbm_to_vmem [thread:$0]  %s1, 768, %s29, [#allocation6], 128, 128, 8
    $region9: #{tpu_custom_call.1} parent=1 // pred_fallthru
      _
    // Predicated region
    $region10: #{tpu_custom_call.1} parent=1 // pred_check
      _
    $region11: #{tpu_custom_call.1} parent=1 // pred_check_branch
      %36 = sbr.rel (0) target = $region13
    $region12: #{tpu_custom_call.1} parent=1 // pred_region
      %s38 = ssub.s32 640, 640
      %39 = vsyncadd [#allocation6], %s38
      %s40 = sshll.u32 [#allocation7], 4
      %s41 = int_to_ptr.vmem [resolvable:$true] %s40
      %46 = dma.hbm_to_vmem [thread:$0]  %s2, 640, %s41, [#allocation6], 128, 128, 8
    $region13: #{tpu_custom_call.1} parent=1 // pred_fallthru
      _
    // Predicated region
    $region14: #{tpu_custom_call.1} parent=1 // pred_check
      _
    $region15: #{tpu_custom_call.1} parent=1 // pred_check_branch
      %48 = sbr.rel (0) target = $region17
    $region16: #{tpu_custom_call.1} parent=1 // pred_region
      %49 = dma.done [#allocation3], 640
    $region17: #{tpu_custom_call.1} parent=1 // pred_fallthru
      _
    // Predicated region
    $region18: #{tpu_custom_call.1} parent=1 // pred_check
      _
    $region19: #{tpu_custom_call.1} parent=1 // pred_check_branch
      %51 = sbr.rel (0) target = $region21
    $region20: #{tpu_custom_call.1} parent=1 // pred_region
      %52 = dma.done [#allocation6], 768
    $region21: #{tpu_custom_call.1} parent=1 // pred_fallthru
      _
    // Predicated region
    $region22: #{tpu_custom_call.1} parent=1 // pred_check
      _
    $region23: #{tpu_custom_call.1} parent=1 // pred_check_branch
      %54 = sbr.rel (0) target = $region25
    $region24: #{tpu_custom_call.1} parent=1 // pred_region
      %55 = dma.done [#allocation6], 640
    $region25: #{tpu_custom_call.1} parent=1 // pred_fallthru
      _
    %v56 = vld [vmem:[#allocation2] sm:$0xff]
    %v57 = vld [vmem:[#allocation2 + $0x8] sm:$0xff]
    %v58 = vld [vmem:[#allocation2 + $0x10] sm:$0xff]
    %v59 = vld [vmem:[#allocation2 + $0x18] sm:$0xff]
    %v60 = vld [vmem:[#allocation2 + $0x20] sm:$0xff]
    %v61 = vld [vmem:[#allocation5] sm:$0xff]
    %v62 = vld [vmem:[#allocation5 + $0x8] sm:$0xff]
    %v63 = vld [vmem:[#allocation5 + $0x10] sm:$0xff]
    %v64 = vld [vmem:[#allocation5 + $0x18] sm:$0xff]
    %v65 = vld [vmem:[#allocation5 + $0x20] sm:$0xff]
    %v66 = vld [vmem:[#allocation5 + $0x28] sm:$0xff]
    %v67 = vld [vmem:[#allocation7] sm:$0xff]
    %v68 = vld [vmem:[#allocation7 + $0x8] sm:$0xff]
    %v69 = vld [vmem:[#allocation7 + $0x10] sm:$0xff]
    %v70 = vld [vmem:[#allocation7 + $0x18] sm:$0xff]
    %v71 = vld [vmem:[#allocation7 + $0x20] sm:$0xff]
    %vm72 = vcmask 392192
    %v74 = vsel %vm72, %v56, 0
    %v77 = vsel %vm72, %v57, 0
    %v80 = vsel %vm72, %v58, 0
    %v83 = vsel %vm72, %v59, 0
    %v86 = vsel %vm72, %v60, 0
    %88 = vmatprep.subr.mxu0 0.0
    %89 = vmatpush1.msra.mxu0 0.0
    %90 = vmatprep.subr.mxu0 0.0
    %91 = vmatpush1.msra.mxu0 0.0
    %92 = vmatprep.subr.mxu0 0.0
    %93 = vmatpush1.msra.mxu0 0.0
    %94 = vmatprep.subr.mxu0 0.0
    %95 = vmatpush1.msra.mxu0 0.0
    %96 = vmatprep.subr.mxu0 0.0
    %97 = vmatpush1.msra.mxu0 0.0
    %98 = vmatprep.subr.mxu0 0.0
    %99 = vmatpush1.msra.mxu0 0.0
    %100 = vmatprep.subr.mxu0 0.0
    %101 = vmatpush1.msra.mxu0 0.0
    %102 = vmatprep.subr.mxu0 0.0
    %103 = vmatpush1.msra.mxu0 0.0
    %104 = vmatprep.subr.mxu0 0.0
    %105 = vmatpush1.msra.mxu0 0.0
    %106 = vmatprep.subr.mxu0 0.0
    %107 = vmatpush1.msra.mxu0 0.0
    %108 = vmatprep.subr.mxu0 0.0
    %109 = vmatpush1.msra.mxu0 %v66
    %110 = vmatprep.subr.mxu0 0.0
    %111 = vmatpush1.msra.mxu0 %v65
    %112 = vmatprep.subr.mxu0 0.0
    %113 = vmatpush1.msra.mxu0 %v64
    %114 = vmatprep.subr.mxu0 0.0
    %115 = vmatpush1.msra.mxu0 %v63
    %116 = vmatprep.subr.mxu0 0.0
    %117 = vmatpush1.msra.mxu0 %v62
    %118 = vmatprep.subr.mxu0 0.0
    %119 = vmatpush1.msra.mxu0 %v61
    %120 = vmatprep.subr.mxu0 0.0
    %121 = vmatpush2.msra.mxu0 0.0
    %122 = vmatprep.subr.mxu0 0.0
    %123 = vmatpush2.msra.mxu0 0.0
    %124 = vmatprep.subr.mxu0 0.0
    %125 = vmatpush2.msra.mxu0 0.0
    %126 = vmatprep.subr.mxu0 0.0
    %127 = vmatpush2.msra.mxu0 0.0
    %128 = vmatprep.subr.mxu0 0.0
    %129 = vmatpush2.msra.mxu0 0.0
    %130 = vmatprep.subr.mxu0 0.0
    %131 = vmatpush2.msra.mxu0 0.0
    %132 = vmatprep.subr.mxu0 0.0
    %133 = vmatpush2.msra.mxu0 0.0
    %134 = vmatprep.subr.mxu0 0.0
    %135 = vmatpush2.msra.mxu0 0.0
    %136 = vmatprep.subr.mxu0 0.0
    %137 = vmatpush2.msra.mxu0 0.0
    %138 = vmatprep.subr.mxu0 0.0
    %139 = vmatpush2.msra.mxu0 0.0
    %140 = vmatprep.subr.mxu0 0.0
    %141 = vmatpush2.msra.mxu0 0.0
    %142 = vmatprep.subr.mxu0 0.0
    %143 = vmatpush2.msra.mxu0 0.0
    %144 = vmatprep.subr.mxu0 0.0
    %145 = vmatpush2.msra.mxu0 0.0
    %146 = vmatprep.subr.mxu0 0.0
    %147 = vmatpush2.msra.mxu0 0.0
    %148 = vmatprep.subr.mxu0 0.0
    %149 = vmatpush2.msra.mxu0 0.0
    %150 = vmatprep.subr.mxu0 0.0
    %151 = vmatpush2.msra.mxu0 0.0
    %152 = vmatprep.mubr.f32.mxu0 0.0
    %153 = vmatmul.mubr.f32.gmra.mxu0 %v74
    %v154 = vpop.f32.mrf.mxu0
    %v155 = vadd.f32 %v67, %v154
    %v156 = vpop.f32.mrf.mxu0
    %157 = vmatprep.mubr.f32.mxu0 0.0
    %158 = vmatmul.mubr.f32.gmra.mxu0 %v77
    %v159 = vpop.f32.mrf.mxu0
    %v160 = vadd.f32 %v68, %v159
    %v161 = vpop.f32.mrf.mxu0
    %162 = vmatprep.mubr.f32.mxu0 0.0
    %163 = vmatmul.mubr.f32.gmra.mxu0 %v80
    %v164 = vpop.f32.mrf.mxu0
    %v165 = vadd.f32 %v69, %v164
    %v166 = vpop.f32.mrf.mxu0
    %167 = vmatprep.mubr.f32.mxu0 0.0
    %168 = vmatmul.mubr.f32.gmra.mxu0 %v83
    %v169 = vpop.f32.mrf.mxu0
    %v170 = vadd.f32 %v70, %v169
    %v171 = vpop.f32.mrf.mxu0
    %172 = vmatprep.mubr.f32.mxu0 0.0
    %173 = vmatmul.mubr.f32.gmra.mxu0 %v86
    %v174 = vpop.f32.mrf.mxu0
    %v175 = vadd.f32 %v71, %v174
    %v176 = vpop.f32.mrf.mxu0
    %177 = vdwg.mxu0
    %178 = vst [vmem:[#allocation8] sm:$0xff] %v155
    %179 = vst [vmem:[#allocation8 + $0x8] sm:$0xff] %v160
    %180 = vst [vmem:[#allocation8 + $0x10] sm:$0xff] %v165
    %181 = vst [vmem:[#allocation8 + $0x18] sm:$0xff] %v170
    %182 = vst [vmem:[#allocation8 + $0x20] sm:$0xff] %v175
    // Predicated region
    $region26: #{tpu_custom_call.1} parent=1 // pred_check
      _
    $region27: #{tpu_custom_call.1} parent=1 // pred_check_branch
      %184 = sbr.rel (0) target = $region29
    $region28: #{tpu_custom_call.1} parent=1 // pred_region
      %s186 = ssub.s32 640, 640
      %187 = vsyncadd [#allocation4], %s186
      %s188 = sshll.u32 [#allocation8], 4
      %s189 = int_to_ptr.vmem [resolvable:$true] %s188
      %194 = dma.vmem_to_hbm [thread:$0]  %s189, 640, %s3, [#allocation4], 128, 128, 8
    $region29: #{tpu_custom_call.1} parent=1 // pred_fallthru
      _
    // Predicated region
    $region30: #{tpu_custom_call.1} parent=1 // pred_check
      _
    $region31: #{tpu_custom_call.1} parent=1 // pred_check_branch
      %196 = sbr.rel (0) target = $region33
    $region32: #{tpu_custom_call.1} parent=1 // pred_region
      %197 = dma.done [#allocation4], 640
    $region33: #{tpu_custom_call.1} parent=1 // pred_fallthru
      _
    %198 = vsyncpa [#allocation3], 1
    %199 = vsyncpa [#allocation6], 1
    %200 = vsyncpa [#allocation4], 1

</llo_original>
